<compile_context>
chip_gen: v6e
topology: v6e:2x2x1
jax: 0.10.0
libtpu: 0.0.40
codegen_flags: <defaults>
</compile_context>

<pallas_src>
import jax
import jax.numpy as jnp
from jax.experimental import pallas as pl
from jax.experimental.pallas import tpu as pltpu

LANES = 512          # lane-dense last dim: large multiple of 128
BLOCK_ROWS = 1024    # 1024 x 512 x 4 B = 2 MiB per block


def linear_kernel(wb_ref, x_ref, o_ref):
    # wb_ref: (2,) f32 in SMEM -> [weight, bias] scalars (free VPU broadcast)
    # x_ref / o_ref: (block_rows, LANES) f32 lane-dense tiles in VMEM
    w = wb_ref[0]
    b = wb_ref[1]
    o_ref[...] = x_ref[...] * w + b          # pure VPU mul+add, no MXU round-trip


def linear_forward(x, weight, bias, *, block_rows=BLOCK_ROWS):
    """x: (N, 1) f32; weight: (1, 1) torch [out,in] layout; bias: (1,). Returns (N, 1)."""
    n = x.shape[0]

    # ---- lane-dense view: (N, 1) -> (rows, LANES) ----
    # reshape(-1) is free; pad only when N is not lane-aligned, and only up to the
    # next multiple of LANES (never up to a multiple of the block).
    rows = pl.cdiv(n, LANES)
    total = rows * LANES
    x_flat = x.reshape(-1).astype(jnp.float32)
    if total != n:
        x_flat = jnp.pad(x_flat, (0, total - n))
    x2d = x_flat.reshape(rows, LANES)

    # ---- block-size selection ----
    if rows <= block_rows:
        br = rows        # single block == full array dims (always a legal tile shape)
    else:
        br = block_rows  # (br, LANES) % (8, 128) == 0; ragged tail handled by cdiv grid
    grid = (pl.cdiv(rows, br),)

    # ---- weight/bias as SMEM scalars: [w, b] ----
    wb = jnp.concatenate(
        [weight.reshape(-1).astype(jnp.float32), bias.reshape(-1).astype(jnp.float32)]
    )  # (2,) f32

    out2d = pl.pallas_call(
        linear_kernel,
        out_shape=jax.ShapeDtypeStruct((rows, LANES), jnp.float32),
        grid=grid,
        in_specs=[
            pl.BlockSpec(memory_space=pltpu.MemorySpace.SMEM),   # [w, b] scalars
            pl.BlockSpec((br, LANES), lambda i: (i, 0)),         # x tile
        ],
        out_specs=pl.BlockSpec((br, LANES), lambda i: (i, 0)),   # y tile
        compiler_params=pltpu.CompilerParams(
            dimension_semantics=("parallel",),   # shards row-tiles across v7x's 2 TCs
        ),
        cost_estimate=pl.CostEstimate(
            flops=2 * total, transcendentals=0, bytes_accessed=8 * total
        ),
    )(wb, x2d)

    # Restore the (N, 1) torch layout; the slice only exists when padding happened.
    if total != n:
        return out2d.reshape(-1)[:n].reshape(n, 1)
    return out2d.reshape(n, 1)


if __name__ == "__main__":
    # Same input as the reference script: x = unsqueeze(linspace(-2, 2, 100), 1)
    x = jnp.linspace(-2.0, 2.0, 100, dtype=jnp.float32).reshape(100, 1)

    # Deterministic parameter init mimicking torch.nn.Linear(1, 1) default
    # (uniform in [-1/sqrt(in_features), 1/sqrt(in_features)]).
    key = jax.random.PRNGKey(0)
    kw, kb = jax.random.split(key)
    bound = 1.0  # 1 / sqrt(in_features=1)
    weight = jax.random.uniform(kw, (1, 1), jnp.float32, -bound, bound)  # (out, in)
    bias = jax.random.uniform(kb, (1,), jnp.float32, -bound, bound)      # (out,)

    # jit the whole wrapper so XLA fuses the (tiny) pad / slice around the kernel.
    fwd = jax.jit(linear_forward)
    y = jax.block_until_ready(fwd(x, weight, bias))

    # Sanity check against plain JAX reference.
    y_ref = x @ weight.T + bias
    assert y.shape == (100, 1)
    assert jnp.allclose(y, y_ref, atol=1e-6), "mismatch vs reference"

    print("KERNEL_OK")
</pallas_src>

<mosaic_0001>
module attributes {stable_mosaic.version = 11 : i64} {
  func.func @linear_kernel(%arg0: i32, %arg1: memref<2xf32, #tpu.memory_space<smem>>, %arg2: memref<1x512xf32, #tpu.memory_space<vmem>>, %arg3: memref<1x512xf32, #tpu.memory_space<vmem>>) attributes {dimension_semantics = [#tpu.dimension_semantics<parallel>], iteration_bounds = array<i64: 1>, scalar_prefetch = 0 : i64, scratch_operands = 0 : i64, tpu.core_type = #tpu.core_type<tc>, window_params = [{transform_indices = @transform_0, window_bounds = array<i64: 2>}, {transform_indices = @transform_1, window_bounds = array<i64: 1, 512>}, {transform_indices = @transform_2, window_bounds = array<i64: 1, 512>}]} {
    %c0 = arith.constant 0 : index
    %0 = memref.load %arg1[%c0] : memref<2xf32, #tpu.memory_space<smem>>
    %c1 = arith.constant 1 : index
    %1 = memref.load %arg1[%c1] : memref<2xf32, #tpu.memory_space<smem>>
    %c0_0 = arith.constant 0 : index
    %c0_1 = arith.constant 0 : index
    %2 = vector.load %arg2[%c0_0, %c0_1] : memref<1x512xf32, #tpu.memory_space<vmem>>, vector<1x512xf32>
    %3 = vector.broadcast %0 : f32 to vector<1x512xf32>
    %4 = arith.mulf %2, %3 : vector<1x512xf32>
    %5 = vector.broadcast %1 : f32 to vector<1x512xf32>
    %6 = arith.addf %4, %5 : vector<1x512xf32>
    %c0_2 = arith.constant 0 : index
    %c0_3 = arith.constant 0 : index
    %7 = vector.load %arg3[%c0_2, %c0_3] : memref<1x512xf32, #tpu.memory_space<vmem>>, vector<1x512xf32>
    tpu.vector_store %arg3[%c0_2, %c0_3], %6 {strides = array<i32>} : memref<1x512xf32, #tpu.memory_space<vmem>>, vector<1x512xf32>,
    return
  }
  func.func @transform_0(%arg0: i32) -> i32 {
    %c0_i32 = arith.constant 0 : i32
    %c0_i32_0 = arith.constant 0 : i32
    return %c0_i32 : i32
  }
  func.func @transform_1(%arg0: i32) -> (i32, i32) {
    %c0_i32 = arith.constant 0 : i32
    %c0_i32_0 = arith.constant 0 : i32
    return %arg0, %c0_i32 : i32, i32
  }
  func.func @transform_2(%arg0: i32) -> (i32, i32) {
    %c0_i32 = arith.constant 0 : i32
    %c0_i32_0 = arith.constant 0 : i32
    return %arg0, %c0_i32 : i32, i32
  }
}

</mosaic_0001>

<llo_original>
// kernel: linear_forward.1
$region0: #{linear_forward.1}
  #allocation0 [shape = 'u32[]', space=smem, size = 0x4, offset = 0x4, fixed_abs, tag = 'smem constant byte address 0x4 - core index']
  #allocation1 [shape = 'u32[144,128]{1,0:T(1,128)}', space=vmem, size = 0x12000, scoped, tag = 'internal scratch']
  %s0 = inlined_call_operand.vmem [shape: f32[2], index: 0, kind: input, shape index: {}]
  %s1 = inlined_call_operand.vmem [shape: f32[1,512], index: 1, kind: input, shape index: {}]
  %s2 = inlined_call_operand.vmem [shape: f32[1,512], index: 2, kind: output, shape index: {}]
  %s3 = sld [smem:[#allocation0]]
  $region22: #{linear_forward.1} parent=0
    _
  %s5 = ssub.s32 1, %s3
  %s6 = scalar_select 0, %s5, %s3
  $region1: #{linear_forward.1} parent=0
    #allocation2 [shape = 'u8[512]{0}', space=smem, size = 0x200, scoped, tag = 'input window, operand 0, single buffered']
    #allocation3 [shape = 's32[1]{0}', space=sflag, size = 0x4, scoped, tag = 'scoped memory for linear_forward.1']
    %7 = vsyncpa [#allocation3], 0
    // Predicated region
    $region2: #{linear_forward.1} parent=1 // pred_check
      _
    $region3: #{linear_forward.1} parent=1 // pred_check_branch
      %9 = sbr.rel (0) target = $region5
    $region4: #{linear_forward.1} parent=1 // pred_region
      %s11 = ssub.s32 16, 16
      %12 = vsyncadd [#allocation3], %s11
      %s14 = sshll.u32 %s0, 4
      %s15 = int_to_ptr.vmem [resolvable:$true] %s14
      %17 = dma.vmem_to_smem %s15, 16, [#allocation2], [#allocation3]
    $region5: #{linear_forward.1} parent=1 // pred_fallthru
      _
    // Predicated region
    $region6: #{linear_forward.1} parent=1 // pred_check
      _
    $region7: #{linear_forward.1} parent=1 // pred_check_branch
      %19 = sbr.rel (0) target = $region9
    $region8: #{linear_forward.1} parent=1 // pred_region
      _
    $region9: #{linear_forward.1} parent=1 // pred_fallthru
      _
    // Predicated region
    $region10: #{linear_forward.1} parent=1 // pred_check
      _
    $region11: #{linear_forward.1} parent=1 // pred_check_branch
      %21 = sbr.rel (0) target = $region13
    $region12: #{linear_forward.1} parent=1 // pred_region
      %22 = dma.done [#allocation3], 16
    $region13: #{linear_forward.1} parent=1 // pred_fallthru
      _
    %23 = sfence
    %s24 = sld [smem:[#allocation2]]
    %s25 = sld [smem:[#allocation2 + $0x1]]
    %v26 = vld [vmem:[%s1] sm:$0xf]
    %v27 = vstv %s24
    %v28 = vmul.f32 %v26, %v27
    %v29 = vstv %s25
    %v30 = vadd.f32 %v28, %v29
    %v31 = vlaneseq
    %vm32 = vcmp.ge.s32.totalorder %v31, 0
    %vm33 = vcmp.lt.s32.totalorder %v31, 512
    %vm34 = vmand %vm32, %vm33
    %35 = vst.msk [vmem:[%s2] sm:$0xf] %vm34, %v30
    // Predicated region
    $region14: #{linear_forward.1} parent=1 // pred_check
      _
    $region15: #{linear_forward.1} parent=1 // pred_check_branch
      %37 = sbr.rel (0) target = $region17
    $region16: #{linear_forward.1} parent=1 // pred_region
      _
    $region17: #{linear_forward.1} parent=1 // pred_fallthru
      _
    // Predicated region
    $region18: #{linear_forward.1} parent=1 // pred_check
      _
    $region19: #{linear_forward.1} parent=1 // pred_check_branch
      %39 = sbr.rel (0) target = $region21
    $region20: #{linear_forward.1} parent=1 // pred_region
      _
    $region21: #{linear_forward.1} parent=1 // pred_fallthru
      _
    %40 = vsyncpa [#allocation3], 1

</llo_original>
